<compile_context>
chip_gen: v7x
topology: tpu7x:2x2x1
jax: 0.10.0
libtpu: 0.0.40
codegen_flags: <defaults>
</compile_context>

<pallas_src>
import functools

import jax
import jax.numpy as jnp
from jax.experimental import pallas as pl
from jax.experimental.pallas import tpu as pltpu

BN_EPS = 1e-5
LANE = 128
BF16_SUBLANE = 16          # minimum packed (sublane, lane) tile for bf16 is (16, 128)


def _round_up(x, m):
    return (x + m - 1) // m * m


def _vmem_limit_bytes():
    """Generation-aware scoped-VMEM limit: big on 128-MiB parts, v7x-safe default."""
    kind = ""
    try:
        kind = jax.devices()[0].device_kind.lower()
    except Exception:
        pass
    if ("v5" in kind) or ("v6" in kind):
        return 100 * 1024 * 1024          # 128 MiB physical VMEM parts
    return 48 * 1024 * 1024               # v7x (64 MiB physical) / unknown


# ----------------------------------------------------------------------------
# Pass 1: accumulate per-feature sum / sumsq of h = x @ W1, finalize into the
# folded BN affine (scale, shift).  grid = (hidden_tiles, row_tiles).
# ----------------------------------------------------------------------------
def _stats_kernel(x_ref, w1_ref, gamma_ref, beta_ref,
                  scale_ref, shift_ref, sum_sc, sumsq_sc, *, n_rows):
    i = pl.program_id(1)                       # row-tile (reduction) axis

    @pl.when(i == 0)
    def _():
        sum_sc[...] = jnp.zeros_like(sum_sc)
        sumsq_sc[...] = jnp.zeros_like(sumsq_sc)

    # MXU matmul: bf16 operands, f32 accumulation.
    h = jnp.dot(x_ref[...], w1_ref[...], preferred_element_type=jnp.float32)
    # Reduce only down to 8 sublanes per step (vreg-aligned adds, no cross-
    # sublane XLU work on the hot path).
    hr = h.reshape(-1, 8, h.shape[1])
    sum_sc[...] += jnp.sum(hr, axis=0)
    sumsq_sc[...] += jnp.sum(hr * hr, axis=0)

    @pl.when(i == pl.num_programs(1) - 1)
    def _():
        inv_n = jnp.float32(1.0 / n_rows)      # true batch size (padded rows are zero)
        s = jnp.sum(sum_sc[...], axis=0, keepdims=True)
        sq = jnp.sum(sumsq_sc[...], axis=0, keepdims=True)
        mean = s * inv_n
        # TODO(synk): use a shifted / Welford-style accumulation if features are
        # far from zero-centered (E[h^2]-E[h]^2 cancels catastrophically there).
        var = jnp.maximum(sq * inv_n - mean * mean, 0.0)   # biased var (BN training)
        scale = gamma_ref[...] * jax.lax.rsqrt(var + BN_EPS)
        scale_ref[...] = scale
        shift_ref[...] = beta_ref[...] - mean * scale


# ----------------------------------------------------------------------------
# Pass 2: per row-tile  out = relu(h * scale + shift) @ W2  with h = x @ W1.
# ----------------------------------------------------------------------------
def _fused_out_kernel(x_ref, w1_ref, w2_ref, scale_ref, shift_ref, o_ref):
    h = jnp.dot(x_ref[...], w1_ref[...], preferred_element_type=jnp.float32)
    h = jnp.maximum(h * scale_ref[...] + shift_ref[...], 0.0)   # fused BN FMA + ReLU
    o_ref[...] = jnp.dot(h.astype(jnp.bfloat16), w2_ref[...],
                         preferred_element_type=jnp.float32).astype(o_ref.dtype)


def mlp_forward(x, w1, w2, gamma, beta, *, tile_n=None):
    """x: (N, in_dim); w1: (hidden, in_dim); w2: (out_dim, hidden);
    gamma, beta: (hidden,).  Returns (N, out_dim) float32."""
    n, in_dim = x.shape
    hidden_dim = w1.shape[0]
    out_dim = w2.shape[0]

    vmem_limit = _vmem_limit_bytes()

    # Feature padding: contraction dim (in_dim) only to a multiple of 16
    # (bf16 sublane packing); hidden / out stay lane-dense (multiple of 128).
    in_p = _round_up(max(in_dim, BF16_SUBLANE), BF16_SUBLANE)
    h_p = _round_up(hidden_dim, LANE)
    out_p = _round_up(out_dim, LANE)

    # Generation-aware row tile, rounded to the bf16 packed sublane tile (16),
    # clamped so tiny batches are only padded to 16 rows, not a whole tile.
    if tile_n is None:
        tile_n = 2048 if vmem_limit > 64 * 1024 * 1024 else 1024
    tile_n = _round_up(max(BF16_SUBLANE,
                           min(tile_n, _round_up(n, BF16_SUBLANE))), BF16_SUBLANE)
    n_p = _round_up(n, tile_n)
    n_tiles = n_p // tile_n

    tile_h = min(h_p, LANE)                    # hidden-column tile for pass 1
    h_tiles = h_p // tile_h

    # bf16 matmul operands, zero-padded (linears have no bias, so zero padding
    # contributes nothing to the matmuls or the BN statistics).
    x_p = jnp.zeros((n_p, in_p), jnp.bfloat16).at[:n, :in_dim].set(
        x.astype(jnp.bfloat16))
    w1_t = jnp.zeros((in_p, h_p), jnp.bfloat16).at[:in_dim, :hidden_dim].set(
        w1.T.astype(jnp.bfloat16))
    w2_t = jnp.zeros((h_p, out_p), jnp.bfloat16).at[:hidden_dim, :out_dim].set(
        w2.T.astype(jnp.bfloat16))
    gamma_p = jnp.zeros((1, h_p), jnp.float32).at[0, :hidden_dim].set(
        gamma.astype(jnp.float32))
    beta_p = jnp.zeros((1, h_p), jnp.float32).at[0, :hidden_dim].set(
        beta.astype(jnp.float32))

    single = pl.Buffered(1)                    # constant-index-map residents

    # ---------------- pass 1: BN statistics -> folded (scale, shift) ---------
    scale, shift = pl.pallas_call(
        functools.partial(_stats_kernel, n_rows=n),
        out_shape=(jax.ShapeDtypeStruct((1, h_p), jnp.float32),
                   jax.ShapeDtypeStruct((1, h_p), jnp.float32)),
        grid_spec=pltpu.PrefetchScalarGridSpec(
            num_scalar_prefetch=0,
            grid=(h_tiles, n_tiles),
            in_specs=[
                pl.BlockSpec((tile_n, in_p), lambda j, i: (i, 0)),     # x row tile
                pl.BlockSpec((in_p, tile_h), lambda j, i: (0, j),
                             pipeline_mode=single),                    # W1 columns
                pl.BlockSpec((1, tile_h), lambda j, i: (0, j),
                             pipeline_mode=single),                    # gamma
                pl.BlockSpec((1, tile_h), lambda j, i: (0, j),
                             pipeline_mode=single),                    # beta
            ],
            out_specs=(
                pl.BlockSpec((1, tile_h), lambda j, i: (0, j)),        # scale
                pl.BlockSpec((1, tile_h), lambda j, i: (0, j)),        # shift
            ),
            scratch_shapes=[pltpu.VMEM((8, tile_h), jnp.float32),
                            pltpu.VMEM((8, tile_h), jnp.float32)],
        ),
        compiler_params=pltpu.CompilerParams(
            dimension_semantics=("parallel", "arbitrary"),
            vmem_limit_bytes=vmem_limit),
        cost_estimate=pl.CostEstimate(
            flops=2 * n_p * in_p * h_p,
            transcendentals=0,
            bytes_accessed=(h_tiles * n_p * in_p * 2) + (in_p * h_p * 2)
                           + 4 * h_p * 4),
    )(x_p, w1_t, gamma_p, beta_p)

    # ---------------- pass 2: normalize + ReLU + second matmul ---------------
    out_padded = pl.pallas_call(
        _fused_out_kernel,
        out_shape=jax.ShapeDtypeStruct((n_p, out_p), jnp.bfloat16),
        grid_spec=pltpu.PrefetchScalarGridSpec(
            num_scalar_prefetch=0,
            grid=(n_tiles,),
            in_specs=[
                pl.BlockSpec((tile_n, in_p), lambda i: (i, 0)),        # x row tile
                pl.BlockSpec((in_p, h_p), lambda i: (0, 0),
                             pipeline_mode=single),                    # W1 resident
                pl.BlockSpec((h_p, out_p), lambda i: (0, 0),
                             pipeline_mode=single),                    # W2 resident
                pl.BlockSpec((1, h_p), lambda i: (0, 0),
                             pipeline_mode=single),                    # scale
                pl.BlockSpec((1, h_p), lambda i: (0, 0),
                             pipeline_mode=single),                    # shift
            ],
            out_specs=pl.BlockSpec((tile_n, out_p), lambda i: (i, 0)),
        ),
        compiler_params=pltpu.CompilerParams(
            dimension_semantics=("parallel",),                         # megacore-shardable
            vmem_limit_bytes=vmem_limit),
        cost_estimate=pl.CostEstimate(
            flops=2 * n_p * (in_p * h_p + h_p * out_p),
            transcendentals=0,
            bytes_accessed=(n_p * in_p * 2) + (in_p * h_p * 2)
                           + (h_p * out_p * 2) + (n_p * out_p * 2)),
    )(x_p, w1_t, w2_t, scale, shift)

    return out_padded[:n, :out_dim].astype(jnp.float32)


def reference_forward(x, w1, w2, gamma, beta):
    h = x @ w1.T
    mean = h.mean(axis=0, keepdims=True)
    var = ((h - mean) ** 2).mean(axis=0, keepdims=True)
    h = (h - mean) / jnp.sqrt(var + BN_EPS) * gamma + beta
    h = jnp.maximum(h, 0.0)
    return h @ w2.T


if __name__ == "__main__":
    # Small shapes consistent with the module: a batch of node features.
    N, INPUT_DIM, HIDDEN_DIM, OUTPUT_DIM = 8, 16, 32, 16

    key = jax.random.PRNGKey(0)
    kx, k1, k2 = jax.random.split(key, 3)

    x = jax.random.normal(kx, (N, INPUT_DIM), dtype=jnp.float32)
    w1 = jax.random.normal(k1, (HIDDEN_DIM, INPUT_DIM), dtype=jnp.float32) * 0.1
    w2 = jax.random.normal(k2, (OUTPUT_DIM, HIDDEN_DIM), dtype=jnp.float32) * 0.1
    gamma = jnp.ones((HIDDEN_DIM,), dtype=jnp.float32)   # BN weight init
    beta = jnp.zeros((HIDDEN_DIM,), dtype=jnp.float32)   # BN bias init

    out = mlp_forward(x, w1, w2, gamma, beta)
    out = jax.block_until_ready(out)

    ref = reference_forward(x, w1, w2, gamma, beta)
    assert out.shape == (N, OUTPUT_DIM)
    # bf16 MXU operands + bf16 output store vs f32 reference -> loose tolerance.
    assert jnp.allclose(out, ref, atol=5e-2, rtol=5e-2), float(
        jnp.max(jnp.abs(out - ref)))

    print("KERNEL_OK")
</pallas_src>

<mosaic_0001>
module attributes {stable_mosaic.version = 11 : i64} {
  func.func @_stats_kernel(%arg0: i32, %arg1: i32, %arg2: memref<16x16xbf16, #tpu.memory_space<vmem>>, %arg3: memref<16x128xbf16, #tpu.memory_space<vmem>>, %arg4: memref<1x128xf32, #tpu.memory_space<vmem>>, %arg5: memref<1x128xf32, #tpu.memory_space<vmem>>, %arg6: memref<1x128xf32, #tpu.memory_space<vmem>>, %arg7: memref<1x128xf32, #tpu.memory_space<vmem>>, %arg8: memref<8x128xf32, #tpu.memory_space<vmem>>, %arg9: memref<8x128xf32, #tpu.memory_space<vmem>>) attributes {dimension_semantics = [#tpu.dimension_semantics<parallel>, #tpu.dimension_semantics<arbitrary>], iteration_bounds = array<i64: 1, 1>, scalar_prefetch = 0 : i64, scratch_operands = 2 : i64, tpu.core_type = #tpu.core_type<tc>, window_params = [{transform_indices = @transform_0, window_bounds = array<i64: 16, 16>}, {pipeline_mode = #tpu.pipeline_mode<synchronous>, transform_indices = @transform_1, window_bounds = array<i64: 16, 128>}, {pipeline_mode = #tpu.pipeline_mode<synchronous>, transform_indices = @transform_2, window_bounds = array<i64: 1, 128>}, {pipeline_mode = #tpu.pipeline_mode<synchronous>, transform_indices = @transform_3, window_bounds = array<i64: 1, 128>}, {transform_indices = @transform_4, window_bounds = array<i64: 1, 128>}, {transform_indices = @transform_5, window_bounds = array<i64: 1, 128>}]} {
    %c0_i32 = arith.constant 0 : i32
    %0 = arith.cmpi eq, %arg1, %c0_i32 : i32
    %1 = arith.extui %0 : i1 to i32
    %c0_i32_0 = arith.constant 0 : i32
    %2 = arith.cmpi ne, %1, %c0_i32_0 : i32
    scf.if %2 {
      %cst_16 = arith.constant 0.000000e+00 : f32
      %19 = vector.broadcast %cst_16 : f32 to vector<8x128xf32>
      %c0_17 = arith.constant 0 : index
      %c0_18 = arith.constant 0 : index
      %20 = vector.load %arg8[%c0_17, %c0_18] : memref<8x128xf32, #tpu.memory_space<vmem>>, vector<8x128xf32>
      tpu.vector_store %arg8[%c0_17, %c0_18], %19 {strides = array<i32>} : memref<8x128xf32, #tpu.memory_space<vmem>>, vector<8x128xf32>,
      %cst_19 = arith.constant 0.000000e+00 : f32
      %21 = vector.broadcast %cst_19 : f32 to vector<8x128xf32>
      %c0_20 = arith.constant 0 : index
      %c0_21 = arith.constant 0 : index
      %22 = vector.load %arg9[%c0_20, %c0_21] : memref<8x128xf32, #tpu.memory_space<vmem>>, vector<8x128xf32>
      tpu.vector_store %arg9[%c0_20, %c0_21], %21 {strides = array<i32>} : memref<8x128xf32, #tpu.memory_space<vmem>>, vector<8x128xf32>,
    } else {
    }
    %c0 = arith.constant 0 : index
    %c0_1 = arith.constant 0 : index
    %3 = vector.load %arg2[%c0, %c0_1] : memref<16x16xbf16, #tpu.memory_space<vmem>>, vector<16x16xbf16>
    %c0_2 = arith.constant 0 : index
    %c0_3 = arith.constant 0 : index
    %4 = vector.load %arg3[%c0_2, %c0_3] : memref<16x128xbf16, #tpu.memory_space<vmem>>, vector<16x128xbf16>
    %cst = arith.constant dense<0.000000e+00> : vector<16x128xf32>
    %5 = tpu.matmul %3, %4, %cst {dimension_numbers = #tpu.dot_dimension_numbers<[1], [0], [0], [1], [0, 0, 1, 1], [], []>} : vector<16x16xbf16>, vector<16x128xbf16>, vector<16x128xf32> -> vector<16x128xf32>
    %6 = vector.shape_cast %5 : vector<16x128xf32> to vector<2x8x128xf32>
    %c0_4 = arith.constant 0 : index
    %c0_5 = arith.constant 0 : index
    %7 = vector.load %arg8[%c0_4, %c0_5] : memref<8x128xf32, #tpu.memory_space<vmem>>, vector<8x128xf32>
    %cst_6 = arith.constant dense<0.000000e+00> : vector<8x128xf32>
    %8 = vector.multi_reduction <add>, %6, %cst_6 [0] : vector<2x8x128xf32> to vector<8x128xf32>
    %9 = arith.addf %7, %8 : vector<8x128xf32>
    %c0_7 = arith.constant 0 : index
    %c0_8 = arith.constant 0 : index
    %10 = vector.load %arg8[%c0_7, %c0_8] : memref<8x128xf32, #tpu.memory_space<vmem>>, vector<8x128xf32>
    tpu.vector_store %arg8[%c0_7, %c0_8], %9 {strides = array<i32>} : memref<8x128xf32, #tpu.memory_space<vmem>>, vector<8x128xf32>,
    %c0_9 = arith.constant 0 : index
    %c0_10 = arith.constant 0 : index
    %11 = vector.load %arg9[%c0_9, %c0_10] : memref<8x128xf32, #tpu.memory_space<vmem>>, vector<8x128xf32>
    %12 = arith.mulf %6, %6 : vector<2x8x128xf32>
    %cst_11 = arith.constant dense<0.000000e+00> : vector<8x128xf32>
    %13 = vector.multi_reduction <add>, %12, %cst_11 [0] : vector<2x8x128xf32> to vector<8x128xf32>
    %14 = arith.addf %11, %13 : vector<8x128xf32>
    %c0_12 = arith.constant 0 : index
    %c0_13 = arith.constant 0 : index
    %15 = vector.load %arg9[%c0_12, %c0_13] : memref<8x128xf32, #tpu.memory_space<vmem>>, vector<8x128xf32>
    tpu.vector_store %arg9[%c0_12, %c0_13], %14 {strides = array<i32>} : memref<8x128xf32, #tpu.memory_space<vmem>>, vector<8x128xf32>,
    %c0_i32_14 = arith.constant 0 : i32
    %16 = arith.cmpi eq, %arg1, %c0_i32_14 : i32
    %17 = arith.extui %16 : i1 to i32
    %c0_i32_15 = arith.constant 0 : i32
    %18 = arith.cmpi ne, %17, %c0_i32_15 : i32
    scf.if %18 {
      %c0_16 = arith.constant 0 : index
      %c0_17 = arith.constant 0 : index
      %19 = vector.load %arg8[%c0_16, %c0_17] : memref<8x128xf32, #tpu.memory_space<vmem>>, vector<8x128xf32>
      %cst_18 = arith.constant dense<0.000000e+00> : vector<128xf32>
      %20 = vector.multi_reduction <add>, %19, %cst_18 [0] : vector<8x128xf32> to vector<128xf32>
      %21 = vector.shape_cast %20 : vector<128xf32> to vector<1x128xf32>
      %c0_19 = arith.constant 0 : index
      %c0_20 = arith.constant 0 : index
      %22 = vector.load %arg9[%c0_19, %c0_20] : memref<8x128xf32, #tpu.memory_space<vmem>>, vector<8x128xf32>
      %cst_21 = arith.constant dense<0.000000e+00> : vector<128xf32>
      %23 = vector.multi_reduction <add>, %22, %cst_21 [0] : vector<8x128xf32> to vector<128xf32>
      %24 = vector.shape_cast %23 : vector<128xf32> to vector<1x128xf32>
      %cst_22 = arith.constant 1.250000e-01 : f32
      %25 = vector.broadcast %cst_22 : f32 to vector<1x128xf32>
      %26 = arith.mulf %21, %25 : vector<1x128xf32>
      %cst_23 = arith.constant 1.250000e-01 : f32
      %27 = vector.broadcast %cst_23 : f32 to vector<1x128xf32>
      %28 = arith.mulf %24, %27 : vector<1x128xf32>
      %29 = arith.mulf %26, %26 : vector<1x128xf32>
      %30 = arith.subf %28, %29 : vector<1x128xf32>
      %cst_24 = arith.constant 0.000000e+00 : f32
      %31 = vector.broadcast %cst_24 : f32 to vector<1x128xf32>
      %32 = arith.maximumf %30, %31 : vector<1x128xf32>
      %c0_25 = arith.constant 0 : index
      %c0_26 = arith.constant 0 : index
      %33 = vector.load %arg4[%c0_25, %c0_26] : memref<1x128xf32, #tpu.memory_space<vmem>>, vector<1x128xf32>
      %cst_27 = arith.constant 9.99999974E-6 : f32
      %34 = vector.broadcast %cst_27 : f32 to vector<1x128xf32>
      %35 = arith.addf %32, %34 : vector<1x128xf32>
      %36 = math.rsqrt %35 : vector<1x128xf32>
      %37 = arith.mulf %33, %36 : vector<1x128xf32>
      %c0_28 = arith.constant 0 : index
      %c0_29 = arith.constant 0 : index
      %38 = vector.load %arg6[%c0_28, %c0_29] : memref<1x128xf32, #tpu.memory_space<vmem>>, vector<1x128xf32>
      tpu.vector_store %arg6[%c0_28, %c0_29], %37 {strides = array<i32>} : memref<1x128xf32, #tpu.memory_space<vmem>>, vector<1x128xf32>,
      %c0_30 = arith.constant 0 : index
      %c0_31 = arith.constant 0 : index
      %39 = vector.load %arg5[%c0_30, %c0_31] : memref<1x128xf32, #tpu.memory_space<vmem>>, vector<1x128xf32>
      %40 = arith.mulf %26, %37 : vector<1x128xf32>
      %41 = arith.subf %39, %40 : vector<1x128xf32>
      %c0_32 = arith.constant 0 : index
      %c0_33 = arith.constant 0 : index
      %42 = vector.load %arg7[%c0_32, %c0_33] : memref<1x128xf32, #tpu.memory_space<vmem>>, vector<1x128xf32>
      tpu.vector_store %arg7[%c0_32, %c0_33], %41 {strides = array<i32>} : memref<1x128xf32, #tpu.memory_space<vmem>>, vector<1x128xf32>,
    } else {
    }
    return
  }
  func.func @transform_0(%arg0: i32, %arg1: i32) -> (i32, i32) {
    %c0_i32 = arith.constant 0 : i32
    %c0_i32_0 = arith.constant 0 : i32
    return %arg1, %c0_i32 : i32, i32
  }
  func.func @transform_1(%arg0: i32, %arg1: i32) -> (i32, i32) {
    %c0_i32 = arith.constant 0 : i32
    %c0_i32_0 = arith.constant 0 : i32
    return %c0_i32, %arg0 : i32, i32
  }
  func.func @transform_2(%arg0: i32, %arg1: i32) -> (i32, i32) {
    %c0_i32 = arith.constant 0 : i32
    %c0_i32_0 = arith.constant 0 : i32
    return %c0_i32, %arg0 : i32, i32
  }
  func.func @transform_3(%arg0: i32, %arg1: i32) -> (i32, i32) {
    %c0_i32 = arith.constant 0 : i32
    %c0_i32_0 = arith.constant 0 : i32
    return %c0_i32, %arg0 : i32, i32
  }
  func.func @transform_4(%arg0: i32, %arg1: i32) -> (i32, i32) {
    %c0_i32 = arith.constant 0 : i32
    %c0_i32_0 = arith.constant 0 : i32
    return %c0_i32, %arg0 : i32, i32
  }
  func.func @transform_5(%arg0: i32, %arg1: i32) -> (i32, i32) {
    %c0_i32 = arith.constant 0 : i32
    %c0_i32_0 = arith.constant 0 : i32
    return %c0_i32, %arg0 : i32, i32
  }
}

</mosaic_0001>

<llo_original>
// kernel: tpu_custom_call.1
$region0: #{tpu_custom_call.1}
  #allocation0 [shape = 'u32[]', space=smem, size = 0x4, offset = 0x4, fixed_abs, tag = 'smem constant byte address 0x4 - core index']
  #allocation1 [shape = 'u32[144,128]{1,0:T(1,128)}', space=vmem, size = 0x12000, scoped, tag = 'internal scratch']
  #allocation2 [shape = 'f32[8,128]{1,0:T(8,128)}', space=vmem, size = 0x1000, scoped, tag = 'scratch operand']
  #allocation3 [shape = 'f32[8,128]{1,0:T(8,128)}', space=vmem, size = 0x1000, scoped, tag = 'scratch operand']
  %s0 = inlined_call_operand.hbm [shape: bf16[16,16], index: 0, kind: input, shape index: {}]
  %s1 = inlined_call_operand.hbm [shape: bf16[16,128], index: 1, kind: input, shape index: {}]
  %s2 = inlined_call_operand.vmem [shape: f32[1,128], index: 2, kind: input, shape index: {}]
  %s3 = inlined_call_operand.vmem [shape: f32[1,128], index: 3, kind: input, shape index: {}]
  %s4 = inlined_call_operand.hbm [shape: f32[1,128], index: 4, kind: output, shape index: {0}]
  %s5 = inlined_call_operand.hbm [shape: f32[1,128], index: 5, kind: output, shape index: {1}]
  %6 = xla_tuple %s4, %s5
  %s7 = sld [smem:[#allocation0]]
  $region50: #{tpu_custom_call.1} parent=0
    _
  %s9 = ssub.s32 1, %s7
  %s10 = scalar_select 0, %s9, %s7
  $region1: #{tpu_custom_call.1} parent=0
    #allocation4 [shape = 'u8[4096]{0}', space=vmem, size = 0x1000, scoped, tag = 'input window, operand 0, single buffered']
    #allocation5 [shape = 's32[1]{0}', space=sflag, size = 0x4, scoped, tag = 'scoped memory for tpu_custom_call.1']
    #allocation6 [shape = 's32[1]{0}', space=sflag, size = 0x4, scoped, tag = 'scoped memory for tpu_custom_call.1']
    #allocation7 [shape = 'u8[4096]{0}', space=vmem, size = 0x1000, scoped, tag = 'input window, operand 1, single buffered']
    #allocation8 [shape = 's32[1]{0}', space=sflag, size = 0x4, scoped, tag = 'scoped memory for tpu_custom_call.1']
    #allocation9 [shape = 'u8[512]{0}', space=vmem, size = 0x400, scoped, tag = 'output window, operand 0, single buffered']
    #allocation10 [shape = 'u8[512]{0}', space=vmem, size = 0x400, scoped, tag = 'output window, operand 1, single buffered']
    #allocation11 [shape = 's32[1]{0}', space=sflag, size = 0x4, scoped, tag = 'scoped memory for tpu_custom_call.1']
    %11 = vsyncpa [#allocation5], 0
    %12 = vsyncpa [#allocation8], 0
    %13 = vsyncpa [#allocation6], 0
    %14 = vsyncpa [#allocation11], 0
    // Predicated region
    $region2: #{tpu_custom_call.1} parent=1 // pred_check
      _
    $region3: #{tpu_custom_call.1} parent=1 // pred_check_branch
      %16 = sbr.rel (0) target = $region5
    $region4: #{tpu_custom_call.1} parent=1 // pred_region
      %s18 = ssub.s32 128, 128
      %19 = vsyncadd [#allocation5], %s18
      %s20 = sshll.u32 [#allocation4], 4
      %s21 = int_to_ptr.vmem [resolvable:$true] %s20
      %26 = dma.hbm_to_vmem [thread:$0]  %s0, 128, %s21, [#allocation5], 64, 64, 4
    $region5: #{tpu_custom_call.1} parent=1 // pred_fallthru
      _
    // Predicated region
    $region6: #{tpu_custom_call.1} parent=1 // pred_check
      _
    $region7: #{tpu_custom_call.1} parent=1 // pred_check_branch
      %28 = sbr.rel (0) target = $region9
    $region8: #{tpu_custom_call.1} parent=1 // pred_region
      %s30 = ssub.s32 128, 128
      %31 = vsyncadd [#allocation8], %s30
      %s32 = sshll.u32 [#allocation7], 4
      %s33 = int_to_ptr.vmem [resolvable:$true] %s32
      %38 = dma.hbm_to_vmem [thread:$0]  %s1, 128, %s33, [#allocation8], 64, 64, 4
    $region9: #{tpu_custom_call.1} parent=1 // pred_fallthru
      _
    // Predicated region
    $region10: #{tpu_custom_call.1} parent=1 // pred_check
      _
    $region11: #{tpu_custom_call.1} parent=1 // pred_check_branch
      %40 = sbr.rel (0) target = $region13
    $region12: #{tpu_custom_call.1} parent=1 // pred_region
      _
    $region13: #{tpu_custom_call.1} parent=1 // pred_fallthru
      _
    // Predicated region
    $region14: #{tpu_custom_call.1} parent=1 // pred_check
      _
    $region15: #{tpu_custom_call.1} parent=1 // pred_check_branch
      %42 = sbr.rel (0) target = $region17
    $region16: #{tpu_custom_call.1} parent=1 // pred_region
      _
    $region17: #{tpu_custom_call.1} parent=1 // pred_fallthru
      _
    // Predicated region
    $region18: #{tpu_custom_call.1} parent=1 // pred_check
      _
    $region19: #{tpu_custom_call.1} parent=1 // pred_check_branch
      %44 = sbr.rel (0) target = $region21
    $region20: #{tpu_custom_call.1} parent=1 // pred_region
      %45 = dma.done [#allocation5], 128
    $region21: #{tpu_custom_call.1} parent=1 // pred_fallthru
      _
    // Predicated region
    $region22: #{tpu_custom_call.1} parent=1 // pred_check
      _
    $region23: #{tpu_custom_call.1} parent=1 // pred_check_branch
      %47 = sbr.rel (0) target = $region25
    $region24: #{tpu_custom_call.1} parent=1 // pred_region
      %48 = dma.done [#allocation8], 128
    $region25: #{tpu_custom_call.1} parent=1 // pred_fallthru
      _
    %p50 = scmp.eq.s32.totalorder 0, 0
    // Predicated region
    $region26: #{tpu_custom_call.1} parent=1 // pred_check
      %p51 = pneg %p50
    $region27: #{tpu_custom_call.1} parent=1 // pred_check_branch
      %53 = sbr.rel (%p51) target = $region29
    $region28: #{tpu_custom_call.1} parent=1 // pred_region
      %54 = vst [vmem:[#allocation2] sm:$0xff] 0.0
      %55 = vst [vmem:[#allocation3] sm:$0xff] 0.0
    $region29: #{tpu_custom_call.1} parent=1 // pred_fallthru
      _
    %v56 = vld [vmem:[#allocation4] sm:$0xf]
    %v57 = vld [vmem:[#allocation4 + $0x4] sm:$0xf]
    %v58 = vld [vmem:[#allocation7] sm:$0xf]
    %v59 = vld [vmem:[#allocation7 + $0x4] sm:$0xf]
    %v62 = vunpack.c.l.b16 %v56
    %v63 = vunpack.c.l.b16 %v57
    %v64 = vpack.c.b16 %v63, %v62
    %v67 = vunpack.c.l.b16 %v58
    %v68 = vunpack.c.l.b16 %v59
    %v69 = vpack.c.b16 %v68, %v67
    %vm71 = vcmask 130048
    %v73 = vsel %vm71, %v64, 0
    %75 = vmatprep.subr.bf16.mxu0 0
    %76 = vmatpush1.bf16.msra.mxu0 %v69
    %77 = vmatprep.subr.bf16.mxu0 0
    %78 = vmatpush1.bf16.msra.mxu0 0
    %79 = vmatprep.subr.bf16.mxu0 0
    %80 = vmatpush1.bf16.msra.mxu0 0
    %81 = vmatprep.subr.bf16.mxu0 0
    %82 = vmatpush1.bf16.msra.mxu0 0
    %83 = vmatprep.subr.bf16.mxu0 0
    %84 = vmatpush1.bf16.msra.mxu0 0
    %85 = vmatprep.subr.bf16.mxu0 0
    %86 = vmatpush1.bf16.msra.mxu0 0
    %87 = vmatprep.subr.bf16.mxu0 0
    %88 = vmatpush1.bf16.msra.mxu0 0
    %89 = vmatprep.subr.bf16.mxu0 0
    %90 = vmatpush1.bf16.msra.mxu0 0
    %91 = vmatprep.subr.bf16.mxu0 0
    %92 = vmatpush1.bf16.msra.mxu0 0
    %93 = vmatprep.subr.bf16.mxu0 0
    %94 = vmatpush1.bf16.msra.mxu0 0
    %95 = vmatprep.subr.bf16.mxu0 0
    %96 = vmatpush1.bf16.msra.mxu0 0
    %97 = vmatprep.subr.bf16.mxu0 0
    %98 = vmatpush1.bf16.msra.mxu0 0
    %99 = vmatprep.subr.bf16.mxu0 0
    %100 = vmatpush1.bf16.msra.mxu0 0
    %101 = vmatprep.subr.bf16.mxu0 0
    %102 = vmatpush1.bf16.msra.mxu0 0
    %103 = vmatprep.subr.bf16.mxu0 0
    %104 = vmatpush1.bf16.msra.mxu0 0
    %105 = vmatprep.subr.bf16.mxu0 0
    %106 = vmatpush1.bf16.msra.mxu0 0
    %107 = vmatprep.mubr.bf16.mxu0 0
    %108 = vmatmul.mubr.bf16.gmra.mrb[0].mxu0 %v73
    %v109 = vpop.f32.mrb[0].mxu0
    %v110 = vadd.f32 0.0, %v109
    %v111 = vpop.f32.mrb[0].mxu0
    %v112 = vpop.f32.mrb[0].mxu0
    %v113 = vadd.f32 0.0, %v112
    %v114 = vpop.f32.mrb[0].mxu0
    %115 = vdwg.mxu0
    %v116 = vld [vmem:[#allocation2] sm:$0xff]
    %v117 = vadd.f32 %v110, %v113
    %v118 = vadd.f32 %v116, %v117
    %119 = vst [vmem:[#allocation2] sm:$0xff] %v118
    %v120 = vld [vmem:[#allocation3] sm:$0xff]
    %v121 = vmul.f32 %v110, %v110
    %v122 = vmul.f32 %v113, %v113
    %v123 = vadd.f32 %v121, %v122
    %v124 = vadd.f32 %v120, %v123
    %125 = vst [vmem:[#allocation3] sm:$0xff] %v124
    // Predicated region
    $region30: #{tpu_custom_call.1} parent=1 // pred_check
      %p126 = pneg %p50
    $region31: #{tpu_custom_call.1} parent=1 // pred_check_branch
      %128 = sbr.rel (%p126) target = $region33
    $region32: #{tpu_custom_call.1} parent=1 // pred_region
      %v129 = vld [vmem:[#allocation2] sm:$0xff]
      %v130 = vrot.slane %v129, 4
      %v131 = vadd.f32 %v129, %v130
      %v132 = vrot.slane %v131, 2
      %v133 = vadd.f32 %v131, %v132
      %v134 = vrot.slane %v133, 1
      %v135 = vadd.f32 %v133, %v134
      %v136 = vld [vmem:[#allocation3] sm:$0xff]
      %v137 = vrot.slane %v136, 4
      %v138 = vadd.f32 %v136, %v137
      %v139 = vrot.slane %v138, 2
      %v140 = vadd.f32 %v138, %v139
      %v141 = vrot.slane %v140, 1
      %v142 = vadd.f32 %v140, %v141
      %v143 = vmul.f32 %v135, 0.125
      %v144 = vmul.f32 %v142, 0.125
      %v145 = vmul.f32 %v143, %v143
      %v146 = vsub.f32 %v144, %v145
      %v147 = vmax.f32 %v146, 0.0
      %v148 = vld [vmem:[%s2] sm:$0x1]
      %v149 = vadd.f32 %v147, 1e-05
      %v150 = vrsqrt.pop %v149
      %v151 = vmul.f32 %v148, %v150
      %152 = vst [vmem:[#allocation9] sm:$0x1] %v151
      %v153 = vld [vmem:[%s3] sm:$0x1]
      %v154 = vmul.f32 %v143, %v151
      %v155 = vsub.f32 %v153, %v154
      %156 = vst [vmem:[#allocation10] sm:$0x1] %v155
    $region33: #{tpu_custom_call.1} parent=1 // pred_fallthru
      _
    // Predicated region
    $region34: #{tpu_custom_call.1} parent=1 // pred_check
      _
    $region35: #{tpu_custom_call.1} parent=1 // pred_check_branch
      %158 = sbr.rel (0) target = $region37
    $region36: #{tpu_custom_call.1} parent=1 // pred_region
      %s160 = ssub.s32 16, 16
      %161 = vsyncadd [#allocation6], %s160
      %s163 = sshll.u32 [#allocation9], 4
      %s164 = int_to_ptr.vmem [resolvable:$true] %s163
      %166 = dma.vmem_to_hbm [thread:$0]  %s164, 16, %s4, [#allocation6]
    $region37: #{tpu_custom_call.1} parent=1 // pred_fallthru
      _
    // Predicated region
    $region38: #{tpu_custom_call.1} parent=1 // pred_check
      _
    $region39: #{tpu_custom_call.1} parent=1 // pred_check_branch
      %168 = sbr.rel (0) target = $region41
    $region40: #{tpu_custom_call.1} parent=1 // pred_region
      %s170 = ssub.s32 16, 16
      %171 = vsyncadd [#allocation11], %s170
      %s173 = sshll.u32 [#allocation10], 4
      %s174 = int_to_ptr.vmem [resolvable:$true] %s173
      %176 = dma.vmem_to_hbm [thread:$0]  %s174, 16, %s5, [#allocation11]
    $region41: #{tpu_custom_call.1} parent=1 // pred_fallthru
      _
    // Predicated region
    $region42: #{tpu_custom_call.1} parent=1 // pred_check
      _
    $region43: #{tpu_custom_call.1} parent=1 // pred_check_branch
      %178 = sbr.rel (0) target = $region45
    $region44: #{tpu_custom_call.1} parent=1 // pred_region
      %179 = dma.done [#allocation6], 16
    $region45: #{tpu_custom_call.1} parent=1 // pred_fallthru
      _
    // Predicated region
    $region46: #{tpu_custom_call.1} parent=1 // pred_check
      _
    $region47: #{tpu_custom_call.1} parent=1 // pred_check_branch
      %181 = sbr.rel (0) target = $region49
    $region48: #{tpu_custom_call.1} parent=1 // pred_region
      %182 = dma.done [#allocation11], 16
    $region49: #{tpu_custom_call.1} parent=1 // pred_fallthru
      _
    %183 = vsyncpa [#allocation5], 1
    %184 = vsyncpa [#allocation8], 1
    %185 = vsyncpa [#allocation6], 1
    %186 = vsyncpa [#allocation11], 1

</llo_original>
